<compile_context>
chip_gen: v6e
topology: v6e:2x2x1
jax: 0.10.0
libtpu: 0.0.40
codegen_flags: <defaults>
</compile_context>

<pallas_src>
import jax
import jax.numpy as jnp
from jax.experimental import pallas as pl
from jax.experimental.pallas import tpu as pltpu

_H1 = 128    # layer-1 width (native)
_H2P = 128   # layer-2 width, zero-padded 64 -> 128 (lane-dense)
_AP = 128    # output width, zero-padded a_dim -> 128 (lane-dense store)


def _round_up(x, m):
    return ((x + m - 1) // m) * m


def _inverse_model_kernel(x_ref, w1_ref, b1_ref, w2_ref, b2_ref, w3_ref, b3_ref,
                          out_ref):
    # Layer 1: single (Bt, 2F) @ (2F, 128) MXU pass (concat merged in wrapper).
    h1 = jnp.dot(x_ref[...], w1_ref[...],
                 preferred_element_type=jnp.float32) + b1_ref[...]
    h1 = jnp.maximum(h1, 0.0)

    # Layer 2: 64 real + 64 zero-padded output lanes (padding stays 0 thru ReLU).
    h2 = jnp.dot(h1.astype(w2_ref.dtype), w2_ref[...],
                 preferred_element_type=jnp.float32) + b2_ref[...]
    h2 = jnp.maximum(h2, 0.0)

    # Layer 3: lane-dense (Bt, 128) store; real logits live in [:, :a_dim].
    out = jnp.dot(h2.astype(w3_ref.dtype), w3_ref[...],
                  preferred_element_type=jnp.float32) + b3_ref[...]
    out_ref[...] = out.astype(out_ref.dtype)


def init_params(key, f_dim, a_dim):
    """Deterministic f32 init mimicking nn.Linear's U(-1/sqrt(fan_in), ...)."""
    ks = jax.random.split(key, 6)

    def lin(kw, kb, fan_in, fan_out):
        bound = 1.0 / jnp.sqrt(fan_in)
        w = jax.random.uniform(kw, (fan_in, fan_out), jnp.float32, -bound, bound)
        b = jax.random.uniform(kb, (fan_out,), jnp.float32, -bound, bound)
        return w, b

    w1, b1 = lin(ks[0], ks[1], 2 * f_dim, _H1)
    w2, b2 = lin(ks[2], ks[3], _H1, 64)
    w3, b3 = lin(ks[4], ks[5], 64, a_dim)
    return {"w1": w1, "b1": b1, "w2": w2, "b2": b2, "w3": w3, "b3": b3}


def prepare_params(params, a_dim, compute_dtype=jnp.bfloat16):
    """One-time pad/cast so no slicing/reshaping/padding XLA ops run per call.

    Weights -> compute_dtype (bf16 MXU operands), biases stay f32 (added into
    the f32 accumulator). w2/b2 padded to 128 output lanes, w3 padded to
    (128, 128) with zero rows for the padded h2 lanes and zero cols past a_dim.
    """
    w1 = params["w1"].astype(compute_dtype)                                   # (2F, 128)
    b1 = params["b1"].reshape(1, _H1).astype(jnp.float32)                     # (1, 128)

    w2 = jnp.zeros((_H1, _H2P), compute_dtype)
    w2 = w2.at[:, : params["w2"].shape[1]].set(params["w2"].astype(compute_dtype))
    b2 = jnp.zeros((1, _H2P), jnp.float32)
    b2 = b2.at[:, : params["b2"].shape[0]].set(params["b2"])

    w3 = jnp.zeros((_H2P, _AP), compute_dtype)
    w3 = w3.at[: params["w3"].shape[0], :a_dim].set(params["w3"].astype(compute_dtype))
    b3 = jnp.zeros((1, _AP), jnp.float32)
    b3 = b3.at[:, :a_dim].set(params["b3"])

    return {"w1": w1, "b1": b1, "w2": w2, "b2": b2, "w3": w3, "b3": b3}


def inverse_model_forward(state_encoded, next_state_encoded, prepared, a_dim,
                          block_b=256):
    """Returns (B, a_dim) action logits (f32)."""
    B, F = state_encoded.shape
    K = 2 * F
    dtype = prepared["w1"].dtype

    # Merge the concat outside the kernel: one cheap XLA concat, one MXU pass.
    x = jnp.concatenate([state_encoded, next_state_encoded], axis=-1).astype(dtype)

    # Batch tiling: sublane-aligned tiles, pipelined HBM<->VMEM, weights resident.
    Bt = min(block_b, _round_up(B, 8))
    Bp = _round_up(B, Bt)
    if Bp != B:
        x = jnp.pad(x, ((0, Bp - B), (0, 0)))
    grid = (Bp // Bt,)

    flops = 2 * Bp * (K * _H1 + _H1 * _H2P + _H2P * _AP)
    bytes_accessed = (
        x.size * x.dtype.itemsize
        + sum(v.size * v.dtype.itemsize for v in prepared.values())
        + Bp * _AP * 4
    )

    out = pl.pallas_call(
        _inverse_model_kernel,
        out_shape=jax.ShapeDtypeStruct((Bp, _AP), jnp.float32),
        grid=grid,
        in_specs=[
            pl.BlockSpec((Bt, K), lambda i: (i, 0)),      # x tile marches over batch
            pl.BlockSpec((K, _H1), lambda i: (0, 0)),     # weights/biases stay resident
            pl.BlockSpec((1, _H1), lambda i: (0, 0)),
            pl.BlockSpec((_H1, _H2P), lambda i: (0, 0)),
            pl.BlockSpec((1, _H2P), lambda i: (0, 0)),
            pl.BlockSpec((_H2P, _AP), lambda i: (0, 0)),
            pl.BlockSpec((1, _AP), lambda i: (0, 0)),
        ],
        out_specs=pl.BlockSpec((Bt, _AP), lambda i: (i, 0)),
        compiler_params=pltpu.CompilerParams(
            dimension_semantics=("parallel",)),            # shards batch across v7x's 2 TCs
        cost_estimate=pl.CostEstimate(
            flops=flops, transcendentals=0, bytes_accessed=bytes_accessed),
    )(x, prepared["w1"], prepared["b1"], prepared["w2"], prepared["b2"],
      prepared["w3"], prepared["b3"])

    return out[:B, :a_dim]


if __name__ == "__main__":
    key = jax.random.PRNGKey(0)
    B, F_DIM, A_DIM = 8, 32, 4

    k_s, k_ns, k_p = jax.random.split(key, 3)
    state_encoded = jax.random.normal(k_s, (B, F_DIM), jnp.float32)
    next_state_encoded = jax.random.normal(k_ns, (B, F_DIM), jnp.float32)

    params = init_params(k_p, F_DIM, A_DIM)
    prepared = prepare_params(params, A_DIM)          # pad + bf16 cast, done once

    action = inverse_model_forward(state_encoded, next_state_encoded, prepared, A_DIM)
    action = jax.block_until_ready(action)

    # Pure-JAX f32 reference (same math as the PyTorch module).
    x = jnp.concatenate([state_encoded, next_state_encoded], axis=-1)
    h = jnp.maximum(x @ params["w1"] + params["b1"], 0.0)
    h = jnp.maximum(h @ params["w2"] + params["b2"], 0.0)
    ref = h @ params["w3"] + params["b3"]

    assert action.shape == (B, A_DIM)
    # bf16 MXU operands with f32 accumulation -> relaxed tolerance vs f32 ref.
    assert jnp.allclose(action, ref, atol=5e-2, rtol=5e-2), (
        float(jnp.max(jnp.abs(action - ref))))

    print("KERNEL_OK")
</pallas_src>

<mosaic_0001>
module attributes {stable_mosaic.version = 11 : i64} {
  func.func @_inverse_model_kernel(%arg0: i32, %arg1: memref<8x64xbf16, #tpu.memory_space<vmem>>, %arg2: memref<64x128xbf16, #tpu.memory_space<vmem>>, %arg3: memref<1x128xf32, #tpu.memory_space<vmem>>, %arg4: memref<128x128xbf16, #tpu.memory_space<vmem>>, %arg5: memref<1x128xf32, #tpu.memory_space<vmem>>, %arg6: memref<128x128xbf16, #tpu.memory_space<vmem>>, %arg7: memref<1x128xf32, #tpu.memory_space<vmem>>, %arg8: memref<8x128xf32, #tpu.memory_space<vmem>>) attributes {dimension_semantics = [#tpu.dimension_semantics<parallel>], iteration_bounds = array<i64: 1>, scalar_prefetch = 0 : i64, scratch_operands = 0 : i64, tpu.core_type = #tpu.core_type<tc>, window_params = [{transform_indices = @transform_0, window_bounds = array<i64: 8, 64>}, {pipeline_mode = #tpu.pipeline_mode<synchronous>, transform_indices = @transform_1, window_bounds = array<i64: 64, 128>}, {pipeline_mode = #tpu.pipeline_mode<synchronous>, transform_indices = @transform_2, window_bounds = array<i64: 1, 128>}, {pipeline_mode = #tpu.pipeline_mode<synchronous>, transform_indices = @transform_3, window_bounds = array<i64: 128, 128>}, {pipeline_mode = #tpu.pipeline_mode<synchronous>, transform_indices = @transform_4, window_bounds = array<i64: 1, 128>}, {pipeline_mode = #tpu.pipeline_mode<synchronous>, transform_indices = @transform_5, window_bounds = array<i64: 128, 128>}, {pipeline_mode = #tpu.pipeline_mode<synchronous>, transform_indices = @transform_6, window_bounds = array<i64: 1, 128>}, {transform_indices = @transform_7, window_bounds = array<i64: 8, 128>}]} {
    %c0 = arith.constant 0 : index
    %c0_0 = arith.constant 0 : index
    %0 = vector.load %arg1[%c0, %c0_0] : memref<8x64xbf16, #tpu.memory_space<vmem>>, vector<8x64xbf16>
    %c0_1 = arith.constant 0 : index
    %c0_2 = arith.constant 0 : index
    %1 = vector.load %arg2[%c0_1, %c0_2] : memref<64x128xbf16, #tpu.memory_space<vmem>>, vector<64x128xbf16>
    %cst = arith.constant dense<0.000000e+00> : vector<8x128xf32>
    %2 = tpu.matmul %0, %1, %cst {dimension_numbers = #tpu.dot_dimension_numbers<[1], [0], [0], [1], [0, 0, 1, 1], [], []>} : vector<8x64xbf16>, vector<64x128xbf16>, vector<8x128xf32> -> vector<8x128xf32>
    %c0_3 = arith.constant 0 : index
    %c0_4 = arith.constant 0 : index
    %3 = vector.load %arg3[%c0_3, %c0_4] : memref<1x128xf32, #tpu.memory_space<vmem>>, vector<1x128xf32>
    %4 = vector.broadcast %3 : vector<1x128xf32> to vector<8x128xf32>
    %5 = arith.addf %2, %4 : vector<8x128xf32>
    %cst_5 = arith.constant 0.000000e+00 : f32
    %6 = vector.broadcast %cst_5 : f32 to vector<8x128xf32>
    %7 = arith.maximumf %5, %6 : vector<8x128xf32>
    %8 = arith.truncf %7 : vector<8x128xf32> to vector<8x128xbf16>
    %c0_6 = arith.constant 0 : index
    %c0_7 = arith.constant 0 : index
    %9 = vector.load %arg4[%c0_6, %c0_7] : memref<128x128xbf16, #tpu.memory_space<vmem>>, vector<128x128xbf16>
    %cst_8 = arith.constant dense<0.000000e+00> : vector<8x128xf32>
    %10 = tpu.matmul %8, %9, %cst_8 {dimension_numbers = #tpu.dot_dimension_numbers<[1], [0], [0], [1], [0, 0, 1, 1], [], []>} : vector<8x128xbf16>, vector<128x128xbf16>, vector<8x128xf32> -> vector<8x128xf32>
    %c0_9 = arith.constant 0 : index
    %c0_10 = arith.constant 0 : index
    %11 = vector.load %arg5[%c0_9, %c0_10] : memref<1x128xf32, #tpu.memory_space<vmem>>, vector<1x128xf32>
    %12 = vector.broadcast %11 : vector<1x128xf32> to vector<8x128xf32>
    %13 = arith.addf %10, %12 : vector<8x128xf32>
    %cst_11 = arith.constant 0.000000e+00 : f32
    %14 = vector.broadcast %cst_11 : f32 to vector<8x128xf32>
    %15 = arith.maximumf %13, %14 : vector<8x128xf32>
    %16 = arith.truncf %15 : vector<8x128xf32> to vector<8x128xbf16>
    %c0_12 = arith.constant 0 : index
    %c0_13 = arith.constant 0 : index
    %17 = vector.load %arg6[%c0_12, %c0_13] : memref<128x128xbf16, #tpu.memory_space<vmem>>, vector<128x128xbf16>
    %cst_14 = arith.constant dense<0.000000e+00> : vector<8x128xf32>
    %18 = tpu.matmul %16, %17, %cst_14 {dimension_numbers = #tpu.dot_dimension_numbers<[1], [0], [0], [1], [0, 0, 1, 1], [], []>} : vector<8x128xbf16>, vector<128x128xbf16>, vector<8x128xf32> -> vector<8x128xf32>
    %c0_15 = arith.constant 0 : index
    %c0_16 = arith.constant 0 : index
    %19 = vector.load %arg7[%c0_15, %c0_16] : memref<1x128xf32, #tpu.memory_space<vmem>>, vector<1x128xf32>
    %20 = vector.broadcast %19 : vector<1x128xf32> to vector<8x128xf32>
    %21 = arith.addf %18, %20 : vector<8x128xf32>
    %c0_17 = arith.constant 0 : index
    %c0_18 = arith.constant 0 : index
    %22 = vector.load %arg8[%c0_17, %c0_18] : memref<8x128xf32, #tpu.memory_space<vmem>>, vector<8x128xf32>
    tpu.vector_store %arg8[%c0_17, %c0_18], %21 {strides = array<i32>} : memref<8x128xf32, #tpu.memory_space<vmem>>, vector<8x128xf32>,
    return
  }
  func.func @transform_0(%arg0: i32) -> (i32, i32) {
    %c0_i32 = arith.constant 0 : i32
    %c0_i32_0 = arith.constant 0 : i32
    return %arg0, %c0_i32 : i32, i32
  }
  func.func @transform_1(%arg0: i32) -> (i32, i32) {
    %c0_i32 = arith.constant 0 : i32
    %c0_i32_0 = arith.constant 0 : i32
    %c0_i32_1 = arith.constant 0 : i32
    return %c0_i32, %c0_i32_0 : i32, i32
  }
  func.func @transform_2(%arg0: i32) -> (i32, i32) {
    %c0_i32 = arith.constant 0 : i32
    %c0_i32_0 = arith.constant 0 : i32
    %c0_i32_1 = arith.constant 0 : i32
    return %c0_i32, %c0_i32_0 : i32, i32
  }
  func.func @transform_3(%arg0: i32) -> (i32, i32) {
    %c0_i32 = arith.constant 0 : i32
    %c0_i32_0 = arith.constant 0 : i32
    %c0_i32_1 = arith.constant 0 : i32
    return %c0_i32, %c0_i32_0 : i32, i32
  }
  func.func @transform_4(%arg0: i32) -> (i32, i32) {
    %c0_i32 = arith.constant 0 : i32
    %c0_i32_0 = arith.constant 0 : i32
    %c0_i32_1 = arith.constant 0 : i32
    return %c0_i32, %c0_i32_0 : i32, i32
  }
  func.func @transform_5(%arg0: i32) -> (i32, i32) {
    %c0_i32 = arith.constant 0 : i32
    %c0_i32_0 = arith.constant 0 : i32
    %c0_i32_1 = arith.constant 0 : i32
    return %c0_i32, %c0_i32_0 : i32, i32
  }
  func.func @transform_6(%arg0: i32) -> (i32, i32) {
    %c0_i32 = arith.constant 0 : i32
    %c0_i32_0 = arith.constant 0 : i32
    %c0_i32_1 = arith.constant 0 : i32
    return %c0_i32, %c0_i32_0 : i32, i32
  }
  func.func @transform_7(%arg0: i32) -> (i32, i32) {
    %c0_i32 = arith.constant 0 : i32
    %c0_i32_0 = arith.constant 0 : i32
    return %arg0, %c0_i32 : i32, i32
  }
}

</mosaic_0001>

<llo_original>
// kernel: tpu_custom_call.1
$region0: #{tpu_custom_call.1}
  #allocation0 [shape = 'u32[]', space=smem, size = 0x4, offset = 0x4, fixed_abs, tag = 'smem constant byte address 0x4 - core index']
  #allocation1 [shape = 'u32[144,128]{1,0:T(1,128)}', space=vmem, size = 0x12000, scoped, tag = 'internal scratch']
  %s0 = inlined_call_operand.hbm [shape: bf16[8,64], index: 0, kind: input, shape index: {}]
  %s1 = inlined_call_operand.hbm [shape: bf16[64,128], index: 1, kind: input, shape index: {}]
  %s2 = inlined_call_operand.vmem [shape: f32[1,128], index: 2, kind: input, shape index: {}]
  %s3 = inlined_call_operand.hbm [shape: bf16[128,128], index: 3, kind: input, shape index: {}]
  %s4 = inlined_call_operand.vmem [shape: f32[1,128], index: 4, kind: input, shape index: {}]
  %s5 = inlined_call_operand.hbm [shape: bf16[128,128], index: 5, kind: input, shape index: {}]
  %s6 = inlined_call_operand.vmem [shape: f32[1,128], index: 6, kind: input, shape index: {}]
  %s7 = inlined_call_operand.hbm [shape: f32[8,128], index: 7, kind: output, shape index: {}]
  %s8 = sld [smem:[#allocation0]]
  $region54: #{tpu_custom_call.1} parent=0
    _
  %s10 = ssub.s32 1, %s8
  %s11 = scalar_select 0, %s10, %s8
  $region1: #{tpu_custom_call.1} parent=0
    #allocation2 [shape = 'u8[2048]{0}', space=vmem, size = 0x800, scoped, tag = 'input window, operand 0, single buffered']
    #allocation3 [shape = 's32[1]{0}', space=sflag, size = 0x4, scoped, tag = 'scoped memory for tpu_custom_call.1']
    #allocation4 [shape = 's32[1]{0}', space=sflag, size = 0x4, scoped, tag = 'scoped memory for tpu_custom_call.1']
    #allocation5 [shape = 'u8[16384]{0}', space=vmem, size = 0x4000, scoped, tag = 'input window, operand 1, single buffered']
    #allocation6 [shape = 's32[1]{0}', space=sflag, size = 0x4, scoped, tag = 'scoped memory for tpu_custom_call.1']
    #allocation7 [shape = 'u8[32768]{0}', space=vmem, size = 0x8000, scoped, tag = 'input window, operand 3, single buffered']
    #allocation8 [shape = 'u8[32768]{0}', space=vmem, size = 0x8000, scoped, tag = 'input window, operand 5, single buffered']
    #allocation9 [shape = 's32[1]{0}', space=sflag, size = 0x4, scoped, tag = 'scoped memory for tpu_custom_call.1']
    #allocation10 [shape = 'u8[4096]{0}', space=vmem, size = 0x1000, scoped, tag = 'output window, operand 0, single buffered']
    %12 = vsyncpa [#allocation3], 0
    %13 = vsyncpa [#allocation6], 0
    %14 = vsyncpa [#allocation9], 0
    %15 = vsyncpa [#allocation4], 0
    // Predicated region
    $region2: #{tpu_custom_call.1} parent=1 // pred_check
      _
    $region3: #{tpu_custom_call.1} parent=1 // pred_check_branch
      %17 = sbr.rel (0) target = $region5
    $region4: #{tpu_custom_call.1} parent=1 // pred_region
      %s19 = ssub.s32 64, 64
      %20 = vsyncadd [#allocation3], %s19
      %s22 = sshll.u32 [#allocation2], 4
      %s23 = int_to_ptr.vmem [resolvable:$true] %s22
      %25 = dma.hbm_to_vmem [thread:$0]  %s0, 64, %s23, [#allocation3]
    $region5: #{tpu_custom_call.1} parent=1 // pred_fallthru
      _
    // Predicated region
    $region6: #{tpu_custom_call.1} parent=1 // pred_check
      _
    $region7: #{tpu_custom_call.1} parent=1 // pred_check_branch
      %27 = sbr.rel (0) target = $region9
    $region8: #{tpu_custom_call.1} parent=1 // pred_region
      %s29 = ssub.s32 512, 512
      %30 = vsyncadd [#allocation6], %s29
      %s31 = sshll.u32 [#allocation5], 4
      %s32 = int_to_ptr.vmem [resolvable:$true] %s31
      %37 = dma.hbm_to_vmem [thread:$0]  %s1, 512, %s32, [#allocation6], 64, 64, 4
    $region9: #{tpu_custom_call.1} parent=1 // pred_fallthru
      _
    // Predicated region
    $region10: #{tpu_custom_call.1} parent=1 // pred_check
      _
    $region11: #{tpu_custom_call.1} parent=1 // pred_check_branch
      %39 = sbr.rel (0) target = $region13
    $region12: #{tpu_custom_call.1} parent=1 // pred_region
      _
    $region13: #{tpu_custom_call.1} parent=1 // pred_fallthru
      _
    // Predicated region
    $region14: #{tpu_custom_call.1} parent=1 // pred_check
      _
    $region15: #{tpu_custom_call.1} parent=1 // pred_check_branch
      %41 = sbr.rel (0) target = $region17
    $region16: #{tpu_custom_call.1} parent=1 // pred_region
      %s43 = ssub.s32 1024, 1024
      %44 = vsyncadd [#allocation6], %s43
      %s45 = sshll.u32 [#allocation7], 4
      %s46 = int_to_ptr.vmem [resolvable:$true] %s45
      %51 = dma.hbm_to_vmem [thread:$0]  %s3, 1024, %s46, [#allocation6], 64, 64, 4
    $region17: #{tpu_custom_call.1} parent=1 // pred_fallthru
      _
    // Predicated region
    $region18: #{tpu_custom_call.1} parent=1 // pred_check
      _
    $region19: #{tpu_custom_call.1} parent=1 // pred_check_branch
      %53 = sbr.rel (0) target = $region21
    $region20: #{tpu_custom_call.1} parent=1 // pred_region
      _
    $region21: #{tpu_custom_call.1} parent=1 // pred_fallthru
      _
    // Predicated region
    $region22: #{tpu_custom_call.1} parent=1 // pred_check
      _
    $region23: #{tpu_custom_call.1} parent=1 // pred_check_branch
      %55 = sbr.rel (0) target = $region25
    $region24: #{tpu_custom_call.1} parent=1 // pred_region
      %s57 = ssub.s32 1024, 1024
      %58 = vsyncadd [#allocation9], %s57
      %s59 = sshll.u32 [#allocation8], 4
      %s60 = int_to_ptr.vmem [resolvable:$true] %s59
      %65 = dma.hbm_to_vmem [thread:$0]  %s5, 1024, %s60, [#allocation9], 64, 64, 4
    $region25: #{tpu_custom_call.1} parent=1 // pred_fallthru
      _
    // Predicated region
    $region26: #{tpu_custom_call.1} parent=1 // pred_check
      _
    $region27: #{tpu_custom_call.1} parent=1 // pred_check_branch
      %67 = sbr.rel (0) target = $region29
    $region28: #{tpu_custom_call.1} parent=1 // pred_region
      _
    $region29: #{tpu_custom_call.1} parent=1 // pred_fallthru
      _
    // Predicated region
    $region30: #{tpu_custom_call.1} parent=1 // pred_check
      _
    $region31: #{tpu_custom_call.1} parent=1 // pred_check_branch
      %69 = sbr.rel (0) target = $region33
    $region32: #{tpu_custom_call.1} parent=1 // pred_region
      %70 = dma.done [#allocation3], 64
    $region33: #{tpu_custom_call.1} parent=1 // pred_fallthru
      _
    // Predicated region
    $region34: #{tpu_custom_call.1} parent=1 // pred_check
      _
    $region35: #{tpu_custom_call.1} parent=1 // pred_check_branch
      %72 = sbr.rel (0) target = $region37
    $region36: #{tpu_custom_call.1} parent=1 // pred_region
      %73 = dma.done [#allocation6], 512
    $region37: #{tpu_custom_call.1} parent=1 // pred_fallthru
      _
    // Predicated region
    $region38: #{tpu_custom_call.1} parent=1 // pred_check
      _
    $region39: #{tpu_custom_call.1} parent=1 // pred_check_branch
      %75 = sbr.rel (0) target = $region41
    $region40: #{tpu_custom_call.1} parent=1 // pred_region
      %76 = dma.done [#allocation6], 1024
    $region41: #{tpu_custom_call.1} parent=1 // pred_fallthru
      _
    // Predicated region
    $region42: #{tpu_custom_call.1} parent=1 // pred_check
      _
    $region43: #{tpu_custom_call.1} parent=1 // pred_check_branch
      %78 = sbr.rel (0) target = $region45
    $region44: #{tpu_custom_call.1} parent=1 // pred_region
      %79 = dma.done [#allocation9], 1024
    $region45: #{tpu_custom_call.1} parent=1 // pred_fallthru
      _
    %v81 = vld [vmem:[#allocation2] sm:$0xf]
    %v82 = vld [vmem:[#allocation5] sm:$0xf]
    %v83 = vld [vmem:[#allocation5 + $0x4] sm:$0xf]
    %v84 = vld [vmem:[#allocation5 + $0x8] sm:$0xf]
    %v85 = vld [vmem:[#allocation5 + $0xc] sm:$0xf]
    %v86 = vld [vmem:[#allocation5 + $0x10] sm:$0xf]
    %v87 = vld [vmem:[#allocation5 + $0x14] sm:$0xf]
    %v88 = vld [vmem:[#allocation5 + $0x18] sm:$0xf]
    %v89 = vld [vmem:[#allocation5 + $0x1c] sm:$0xf]
    %v90 = vld [vmem:[%s2] sm:$0x1]
    %v92 = vlaneseq
    %v93 = vshrl.u32 %v92, 7
    %v94 = vsub.s32 0, %v93
    %v95 = vrot.slane %v90, %v94
    %v105 = vunpack.c.l.b16 %v82
    %v106 = vunpack.c.l.b16 %v83
    %v107 = vunpack.c.l.b16 %v84
    %v108 = vunpack.c.l.b16 %v85
    %v109 = vunpack.c.l.b16 %v86
    %v110 = vunpack.c.l.b16 %v87
    %v111 = vunpack.c.l.b16 %v88
    %v112 = vunpack.c.l.b16 %v89
    %v113 = vpack.c.b16 %v106, %v105
    %v114 = vpack.c.b16 %v108, %v107
    %v115 = vpack.c.b16 %v110, %v109
    %v116 = vpack.c.b16 %v112, %v111
    %vm121 = vcmask 523264
    %v123 = vsel %vm121, %v81, 0
    %125 = vmatprep.subr.bf16.mxu0 0
    %126 = vmatpush1.bf16.msra.mxu0 0
    %127 = vmatprep.subr.bf16.mxu0 0
    %128 = vmatpush1.bf16.msra.mxu0 0
    %129 = vmatprep.subr.bf16.mxu0 0
    %130 = vmatpush1.bf16.msra.mxu0 0
    %131 = vmatprep.subr.bf16.mxu0 0
    %132 = vmatpush1.bf16.msra.mxu0 0
    %133 = vmatprep.subr.bf16.mxu0 0
    %134 = vmatpush1.bf16.msra.mxu0 %v116
    %135 = vmatprep.subr.bf16.mxu0 0
    %136 = vmatpush1.bf16.msra.mxu0 %v115
    %137 = vmatprep.subr.bf16.mxu0 0
    %138 = vmatpush1.bf16.msra.mxu0 %v114
    %139 = vmatprep.subr.bf16.mxu0 0
    %140 = vmatpush1.bf16.msra.mxu0 %v113
    %141 = vmatprep.subr.bf16.mxu0 0
    %142 = vmatpush2.bf16.msra.mxu0 0
    %143 = vmatprep.subr.bf16.mxu0 0
    %144 = vmatpush2.bf16.msra.mxu0 0
    %145 = vmatprep.subr.bf16.mxu0 0
    %146 = vmatpush2.bf16.msra.mxu0 0
    %147 = vmatprep.subr.bf16.mxu0 0
    %148 = vmatpush2.bf16.msra.mxu0 0
    %149 = vmatprep.subr.bf16.mxu0 0
    %150 = vmatpush2.bf16.msra.mxu0 0
    %151 = vmatprep.subr.bf16.mxu0 0
    %152 = vmatpush2.bf16.msra.mxu0 0
    %153 = vmatprep.subr.bf16.mxu0 0
    %154 = vmatpush2.bf16.msra.mxu0 0
    %155 = vmatprep.subr.bf16.mxu0 0
    %156 = vmatpush2.bf16.msra.mxu0 0
    %157 = vmatprep.mubr.bf16.mxu0 0
    %158 = vmatmul.mubr.bf16.gmra.mxu0 %v123
    %v159 = vpop.f32.mrf.mxu0
    %v160 = vadd.f32 %v95, %v159
    %v161 = vpop.f32.mrf.mxu0
    %v162 = vpop.f32.mrf.mxu0
    %v163 = vpop.f32.mrf.mxu0
    %164 = vdwg.mxu0
    %v165 = vmax.f32 %v160, 0.0
    %v166 = vpack.c.bf16 %v165, %v165
    %v167 = vld [vmem:[#allocation7] sm:$0xf]
    %v168 = vld [vmem:[#allocation7 + $0x4] sm:$0xf]
    %v169 = vld [vmem:[#allocation7 + $0x8] sm:$0xf]
    %v170 = vld [vmem:[#allocation7 + $0xc] sm:$0xf]
    %v171 = vld [vmem:[#allocation7 + $0x10] sm:$0xf]
    %v172 = vld [vmem:[#allocation7 + $0x14] sm:$0xf]
    %v173 = vld [vmem:[#allocation7 + $0x18] sm:$0xf]
    %v174 = vld [vmem:[#allocation7 + $0x1c] sm:$0xf]
    %v175 = vld [vmem:[#allocation7 + $0x20] sm:$0xf]
    %v176 = vld [vmem:[#allocation7 + $0x24] sm:$0xf]
    %v177 = vld [vmem:[#allocation7 + $0x28] sm:$0xf]
    %v178 = vld [vmem:[#allocation7 + $0x2c] sm:$0xf]
    %v179 = vld [vmem:[#allocation7 + $0x30] sm:$0xf]
    %v180 = vld [vmem:[#allocation7 + $0x34] sm:$0xf]
    %v181 = vld [vmem:[#allocation7 + $0x38] sm:$0xf]
    %v182 = vld [vmem:[#allocation7 + $0x3c] sm:$0xf]
    %v183 = vld [vmem:[%s4] sm:$0x1]
    %v185 = vlaneseq
    %v186 = vshrl.u32 %v185, 7
    %v187 = vsub.s32 0, %v186
    %v188 = vrot.slane %v183, %v187
    %v206 = vunpack.c.l.b16 %v167
    %v207 = vunpack.c.l.b16 %v168
    %v208 = vunpack.c.l.b16 %v169
    %v209 = vunpack.c.l.b16 %v170
    %v210 = vunpack.c.l.b16 %v171
    %v211 = vunpack.c.l.b16 %v172
    %v212 = vunpack.c.l.b16 %v173
    %v213 = vunpack.c.l.b16 %v174
    %v214 = vunpack.c.l.b16 %v175
    %v215 = vunpack.c.l.b16 %v176
    %v216 = vunpack.c.l.b16 %v177
    %v217 = vunpack.c.l.b16 %v178
    %v218 = vunpack.c.l.b16 %v179
    %v219 = vunpack.c.l.b16 %v180
    %v220 = vunpack.c.l.b16 %v181
    %v221 = vunpack.c.l.b16 %v182
    %v222 = vpack.c.b16 %v207, %v206
    %v223 = vpack.c.b16 %v209, %v208
    %v224 = vpack.c.b16 %v211, %v210
    %v225 = vpack.c.b16 %v213, %v212
    %v226 = vpack.c.b16 %v215, %v214
    %v227 = vpack.c.b16 %v217, %v216
    %v228 = vpack.c.b16 %v219, %v218
    %v229 = vpack.c.b16 %v221, %v220
    %238 = vmatprep.subr.bf16.mxu0 0
    %239 = vmatpush1.bf16.msra.mxu0 %v229
    %240 = vmatprep.subr.bf16.mxu0 0
    %241 = vmatpush1.bf16.msra.mxu0 %v228
    %242 = vmatprep.subr.bf16.mxu0 0
    %243 = vmatpush1.bf16.msra.mxu0 %v227
    %244 = vmatprep.subr.bf16.mxu0 0
    %245 = vmatpush1.bf16.msra.mxu0 %v226
    %246 = vmatprep.subr.bf16.mxu0 0
    %247 = vmatpush1.bf16.msra.mxu0 %v225
    %248 = vmatprep.subr.bf16.mxu0 0
    %249 = vmatpush1.bf16.msra.mxu0 %v224
    %250 = vmatprep.subr.bf16.mxu0 0
    %251 = vmatpush1.bf16.msra.mxu0 %v223
    %252 = vmatprep.subr.bf16.mxu0 0
    %253 = vmatpush1.bf16.msra.mxu0 %v222
    %254 = vmatprep.subr.bf16.mxu0 0
    %255 = vmatpush2.bf16.msra.mxu0 0
    %256 = vmatprep.subr.bf16.mxu0 0
    %257 = vmatpush2.bf16.msra.mxu0 0
    %258 = vmatprep.subr.bf16.mxu0 0
    %259 = vmatpush2.bf16.msra.mxu0 0
    %260 = vmatprep.subr.bf16.mxu0 0
    %261 = vmatpush2.bf16.msra.mxu0 0
    %262 = vmatprep.subr.bf16.mxu0 0
    %263 = vmatpush2.bf16.msra.mxu0 0
    %264 = vmatprep.subr.bf16.mxu0 0
    %265 = vmatpush2.bf16.msra.mxu0 0
    %266 = vmatprep.subr.bf16.mxu0 0
    %267 = vmatpush2.bf16.msra.mxu0 0
    %268 = vmatprep.subr.bf16.mxu0 0
    %269 = vmatpush2.bf16.msra.mxu0 0
    %270 = vmatprep.mubr.bf16.mxu0 0
    %271 = vmatmul.mubr.bf16.gmra.mxu0 %v166
    %v272 = vpop.f32.mrf.mxu0
    %v273 = vadd.f32 %v188, %v272
    %v274 = vpop.f32.mrf.mxu0
    %v275 = vpop.f32.mrf.mxu0
    %v276 = vpop.f32.mrf.mxu0
    %277 = vdwg.mxu0
    %v278 = vmax.f32 %v273, 0.0
    %v279 = vpack.c.bf16 %v278, %v278
    %v280 = vld [vmem:[#allocation8] sm:$0xf]
    %v281 = vld [vmem:[#allocation8 + $0x4] sm:$0xf]
    %v282 = vld [vmem:[#allocation8 + $0x8] sm:$0xf]
    %v283 = vld [vmem:[#allocation8 + $0xc] sm:$0xf]
    %v284 = vld [vmem:[#allocation8 + $0x10] sm:$0xf]
    %v285 = vld [vmem:[#allocation8 + $0x14] sm:$0xf]
    %v286 = vld [vmem:[#allocation8 + $0x18] sm:$0xf]
    %v287 = vld [vmem:[#allocation8 + $0x1c] sm:$0xf]
    %v288 = vld [vmem:[#allocation8 + $0x20] sm:$0xf]
    %v289 = vld [vmem:[#allocation8 + $0x24] sm:$0xf]
    %v290 = vld [vmem:[#allocation8 + $0x28] sm:$0xf]
    %v291 = vld [vmem:[#allocation8 + $0x2c] sm:$0xf]
    %v292 = vld [vmem:[#allocation8 + $0x30] sm:$0xf]
    %v293 = vld [vmem:[#allocation8 + $0x34] sm:$0xf]
    %v294 = vld [vmem:[#allocation8 + $0x38] sm:$0xf]
    %v295 = vld [vmem:[#allocation8 + $0x3c] sm:$0xf]
    %v296 = vld [vmem:[%s6] sm:$0x1]
    %v298 = vlaneseq
    %v299 = vshrl.u32 %v298, 7
    %v300 = vsub.s32 0, %v299
    %v301 = vrot.slane %v296, %v300
    %v319 = vunpack.c.l.b16 %v280
    %v320 = vunpack.c.l.b16 %v281
    %v321 = vunpack.c.l.b16 %v282
    %v322 = vunpack.c.l.b16 %v283
    %v323 = vunpack.c.l.b16 %v284
    %v324 = vunpack.c.l.b16 %v285
    %v325 = vunpack.c.l.b16 %v286
    %v326 = vunpack.c.l.b16 %v287
    %v327 = vunpack.c.l.b16 %v288
    %v328 = vunpack.c.l.b16 %v289
    %v329 = vunpack.c.l.b16 %v290
    %v330 = vunpack.c.l.b16 %v291
    %v331 = vunpack.c.l.b16 %v292
    %v332 = vunpack.c.l.b16 %v293
    %v333 = vunpack.c.l.b16 %v294
    %v334 = vunpack.c.l.b16 %v295
    %v335 = vpack.c.b16 %v320, %v319
    %v336 = vpack.c.b16 %v322, %v321
    %v337 = vpack.c.b16 %v324, %v323
    %v338 = vpack.c.b16 %v326, %v325
    %v339 = vpack.c.b16 %v328, %v327
    %v340 = vpack.c.b16 %v330, %v329
    %v341 = vpack.c.b16 %v332, %v331
    %v342 = vpack.c.b16 %v334, %v333
    %351 = vmatprep.subr.bf16.mxu0 0
    %352 = vmatpush1.bf16.msra.mxu0 %v342
    %353 = vmatprep.subr.bf16.mxu0 0
    %354 = vmatpush1.bf16.msra.mxu0 %v341
    %355 = vmatprep.subr.bf16.mxu0 0
    %356 = vmatpush1.bf16.msra.mxu0 %v340
    %357 = vmatprep.subr.bf16.mxu0 0
    %358 = vmatpush1.bf16.msra.mxu0 %v339
    %359 = vmatprep.subr.bf16.mxu0 0
    %360 = vmatpush1.bf16.msra.mxu0 %v338
    %361 = vmatprep.subr.bf16.mxu0 0
    %362 = vmatpush1.bf16.msra.mxu0 %v337
    %363 = vmatprep.subr.bf16.mxu0 0
    %364 = vmatpush1.bf16.msra.mxu0 %v336
    %365 = vmatprep.subr.bf16.mxu0 0
    %366 = vmatpush1.bf16.msra.mxu0 %v335
    %367 = vmatprep.subr.bf16.mxu0 0
    %368 = vmatpush2.bf16.msra.mxu0 0
    %369 = vmatprep.subr.bf16.mxu0 0
    %370 = vmatpush2.bf16.msra.mxu0 0
    %371 = vmatprep.subr.bf16.mxu0 0
    %372 = vmatpush2.bf16.msra.mxu0 0
    %373 = vmatprep.subr.bf16.mxu0 0
    %374 = vmatpush2.bf16.msra.mxu0 0
    %375 = vmatprep.subr.bf16.mxu0 0
    %376 = vmatpush2.bf16.msra.mxu0 0
    %377 = vmatprep.subr.bf16.mxu0 0
    %378 = vmatpush2.bf16.msra.mxu0 0
    %379 = vmatprep.subr.bf16.mxu0 0
    %380 = vmatpush2.bf16.msra.mxu0 0
    %381 = vmatprep.subr.bf16.mxu0 0
    %382 = vmatpush2.bf16.msra.mxu0 0
    %383 = vmatprep.mubr.bf16.mxu0 0
    %384 = vmatmul.mubr.bf16.gmra.mxu0 %v279
    %v385 = vpop.f32.mrf.mxu0
    %v386 = vadd.f32 %v301, %v385
    %v387 = vpop.f32.mrf.mxu0
    %v388 = vpop.f32.mrf.mxu0
    %v389 = vpop.f32.mrf.mxu0
    %390 = vdwg.mxu0
    %391 = vst [vmem:[#allocation10] sm:$0xff] %v386
    // Predicated region
    $region46: #{tpu_custom_call.1} parent=1 // pred_check
      _
    $region47: #{tpu_custom_call.1} parent=1 // pred_check_branch
      %393 = sbr.rel (0) target = $region49
    $region48: #{tpu_custom_call.1} parent=1 // pred_region
      %s395 = ssub.s32 128, 128
      %396 = vsyncadd [#allocation4], %s395
      %s398 = sshll.u32 [#allocation10], 4
      %s399 = int_to_ptr.vmem [resolvable:$true] %s398
      %401 = dma.vmem_to_hbm [thread:$0]  %s399, 128, %s7, [#allocation4]
    $region49: #{tpu_custom_call.1} parent=1 // pred_fallthru
      _
    // Predicated region
    $region50: #{tpu_custom_call.1} parent=1 // pred_check
      _
    $region51: #{tpu_custom_call.1} parent=1 // pred_check_branch
      %403 = sbr.rel (0) target = $region53
    $region52: #{tpu_custom_call.1} parent=1 // pred_region
      %404 = dma.done [#allocation4], 128
    $region53: #{tpu_custom_call.1} parent=1 // pred_fallthru
      _
    %405 = vsyncpa [#allocation3], 1
    %406 = vsyncpa [#allocation6], 1
    %407 = vsyncpa [#allocation9], 1
    %408 = vsyncpa [#allocation4], 1

</llo_original>
